<compile_context>
chip_gen: v7x
topology: tpu7x:2x2x1
jax: 0.10.0
libtpu: 0.0.40
codegen_flags: <defaults>
</compile_context>

<pallas_src>
import functools

import jax
import jax.numpy as jnp
from jax.experimental import pallas as pl
from jax.experimental.pallas import tpu as pltpu


def _round_up(a, b):
    return ((a + b - 1) // b) * b


# ------------------------- fused Triplet + MSE kernel -------------------------
def _fused_kernel(x_ref, xp_ref, f_ref, l_ref,      # inputs
                  mse_ref, sup_ref,                 # outputs (SMEM scalars)
                  acc_ref,                          # (1, lane) f32 VMEM scratch
                  *, total_elems, margin, half):
    i = pl.program_id(0)

    @pl.when(i == 0)
    def _():
        # Zero the vector accumulator once.
        acc_ref[...] = jnp.zeros_like(acc_ref)
        # Triplet term: tiny, resident in VMEM -> compute once on step 0.
        f = f_ref[...].astype(jnp.float32)
        diff = f[:half, :] - f[half:2 * half, :]
        dist = jnp.sqrt(jnp.sum(diff * diff, axis=-1, keepdims=True))   # (half, 1)
        is_same = (l_ref[:half, :] == l_ref[half:2 * half, :]).astype(jnp.float32)
        per = is_same * dist + (1.0 - is_same) * jnp.maximum(margin - dist, 0.0)
        sup_ref[0, 0] = jnp.mean(per)

    # MSE partial sum for this tile: cast in-kernel (inputs may be bf16),
    # reduce only over rows (sublane reduce) so lanes stay dense.
    d = x_ref[...].astype(jnp.float32) - xp_ref[...].astype(jnp.float32)
    acc_ref[...] += jnp.sum(d * d, axis=0, keepdims=True)               # (1, lane)

    @pl.when(i == pl.num_programs(0) - 1)
    def _():
        # Single cross-lane reduce + divide + scalar store at the very end.
        mse_ref[0, 0] = jnp.sum(acc_ref[...]) / total_elems


# ------------------------------- Module-level API ------------------------------
def triplet_mse_loss(cae_lambda, x, x_prime, features, labels, margin=10.0,
                     *, lane=512, max_tile_rows=512):
    """Matches TripletMSELoss.forward: returns (loss, supcon_loss, mse_loss)."""
    total = int(x.size)
    bsz, feat_dim = features.shape
    half = bsz // 2

    # Lane-dense slab: last dim = `lane` (multiple of 128); tiles of
    # (tile_rows, lane) rows; tile_rows is a multiple of 8 so the (8,128)
    # tiling constraint always holds, and the grid divides exactly.
    rows_needed = (total + lane - 1) // lane
    n_tiles = (rows_needed + max_tile_rows - 1) // max_tile_rows
    tile_rows = _round_up((rows_needed + n_tiles - 1) // n_tiles, 8)
    rows = n_tiles * tile_rows
    pad = rows * lane - total

    xf = x.reshape(-1)
    xpf = x_prime.reshape(-1)
    if pad:
        # Zero padding in BOTH inputs -> diff is 0 -> contributes nothing.
        xf = jnp.pad(xf, (0, pad))
        xpf = jnp.pad(xpf, (0, pad))
    x2 = xf.reshape(rows, lane)        # native dtype; cast happens in-kernel
    xp2 = xpf.reshape(rows, lane)

    lab2 = labels.reshape(bsz, 1).astype(jnp.int32)

    kernel = functools.partial(
        _fused_kernel,
        total_elems=float(total),
        margin=float(margin),
        half=half,
    )

    # TODO(synk): on v7x a leading size-2 "parallel" grid axis (one per
    # TensorCore) with per-core partial sums could give ~2x on the mem-bound
    # MSE path; kept single-core here for simplicity/portability.
    mse, supcon = pl.pallas_call(
        kernel,
        out_shape=(jax.ShapeDtypeStruct((1, 1), jnp.float32),
                   jax.ShapeDtypeStruct((1, 1), jnp.float32)),
        grid=(n_tiles,),
        in_specs=[
            pl.BlockSpec((tile_rows, lane), lambda i: (i, 0)),
            pl.BlockSpec((tile_rows, lane), lambda i: (i, 0)),
            pl.BlockSpec((bsz, feat_dim), lambda i: (0, 0)),   # resident
            pl.BlockSpec((bsz, 1), lambda i: (0, 0)),          # resident
        ],
        out_specs=(pl.BlockSpec(memory_space=pltpu.MemorySpace.SMEM),
                   pl.BlockSpec(memory_space=pltpu.MemorySpace.SMEM)),
        scratch_shapes=[pltpu.VMEM((1, lane), jnp.float32)],
        compiler_params=pltpu.CompilerParams(
            dimension_semantics=("arbitrary",)),
    )(x2, xp2, features, lab2)

    mse_s = mse[0, 0]
    sup_s = supcon[0, 0]
    loss = cae_lambda * sup_s + mse_s      # scalar glue in plain JAX
    return loss, sup_s, mse_s


# ----------------------------------- Reference ----------------------------------
def _ref_triplet_mse(cae_lambda, x, x_prime, features, labels, margin=10.0):
    bsz = features.shape[0]
    half = bsz // 2
    f = features.astype(jnp.float32)
    diff = f[:half] - f[half:2 * half]
    dist = jnp.linalg.norm(diff, axis=1)
    is_same = (labels[:half] == labels[half:2 * half]).astype(jnp.float32)
    supcon = jnp.mean(is_same * dist + (1.0 - is_same) * jax.nn.relu(margin - dist))
    mse = jnp.mean((x.astype(jnp.float32) - x_prime.astype(jnp.float32)) ** 2)
    return cae_lambda * supcon + mse, supcon, mse


if __name__ == "__main__":
    key = jax.random.PRNGKey(0)
    k1, k2, k3, k4, k5, k6 = jax.random.split(key, 6)

    cae_lambda = 0.5
    margin = 10.0

    # --- Case 1: small NCHW f32, total elements divisible by the lane width ---
    bsz, feat_dim = 8, 32
    x = jax.random.normal(k1, (2, 4, 16, 16), dtype=jnp.float32)
    x_prime = jax.random.normal(k2, (2, 4, 16, 16), dtype=jnp.float32)
    features = jax.random.normal(k3, (bsz, feat_dim), dtype=jnp.float32)
    labels = jax.random.randint(k4, (bsz,), 0, 3, dtype=jnp.int32)

    loss, supcon, mse = triplet_mse_loss(cae_lambda, x, x_prime, features,
                                         labels, margin=margin)
    jax.block_until_ready((loss, supcon, mse))

    ref_loss, ref_supcon, ref_mse = _ref_triplet_mse(cae_lambda, x, x_prime,
                                                     features, labels, margin)
    assert jnp.allclose(loss, ref_loss, rtol=1e-4, atol=1e-4)
    assert jnp.allclose(supcon, ref_supcon, rtol=1e-4, atol=1e-4)
    assert jnp.allclose(mse, ref_mse, rtol=1e-4, atol=1e-4)

    # --- Case 2: ragged total (needs padding path) + bf16 inputs (in-kernel cast) ---
    xb = jax.random.normal(k5, (3, 3, 7, 5), dtype=jnp.bfloat16)
    xpb = jax.random.normal(k6, (3, 3, 7, 5), dtype=jnp.bfloat16)
    loss2, supcon2, mse2 = triplet_mse_loss(cae_lambda, xb, xpb, features,
                                            labels, margin=margin)
    jax.block_until_ready((loss2, supcon2, mse2))
    ref_loss2, ref_supcon2, ref_mse2 = _ref_triplet_mse(cae_lambda, xb, xpb,
                                                        features, labels, margin)
    assert jnp.allclose(loss2, ref_loss2, rtol=1e-3, atol=1e-3)
    assert jnp.allclose(supcon2, ref_supcon2, rtol=1e-3, atol=1e-3)
    assert jnp.allclose(mse2, ref_mse2, rtol=1e-3, atol=1e-3)

    print("KERNEL_OK")
</pallas_src>

<mosaic_0001>
module attributes {stable_mosaic.version = 11 : i64} {
  func.func @_fused_kernel(%arg0: i32, %arg1: memref<8x512xf32, #tpu.memory_space<vmem>>, %arg2: memref<8x512xf32, #tpu.memory_space<vmem>>, %arg3: memref<8x32xf32, #tpu.memory_space<vmem>>, %arg4: memref<8x1xi32, #tpu.memory_space<vmem>>, %arg5: memref<1x1xf32, #tpu.memory_space<smem>>, %arg6: memref<1x1xf32, #tpu.memory_space<smem>>, %arg7: memref<1x512xf32, #tpu.memory_space<vmem>>) attributes {dimension_semantics = [#tpu.dimension_semantics<arbitrary>], iteration_bounds = array<i64: 1>, scalar_prefetch = 0 : i64, scratch_operands = 1 : i64, tpu.core_type = #tpu.core_type<tc>, window_params = [{transform_indices = @transform_0, window_bounds = array<i64: 8, 512>}, {transform_indices = @transform_1, window_bounds = array<i64: 8, 512>}, {pipeline_mode = #tpu.pipeline_mode<synchronous>, transform_indices = @transform_2, window_bounds = array<i64: 8, 32>}, {pipeline_mode = #tpu.pipeline_mode<synchronous>, transform_indices = @transform_3, window_bounds = array<i64: 8, 1>}, {transform_indices = @transform_4, window_bounds = array<i64: 1, 1>}, {transform_indices = @transform_5, window_bounds = array<i64: 1, 1>}]} {
    %c0_i32 = arith.constant 0 : i32
    %0 = arith.cmpi eq, %arg0, %c0_i32 : i32
    %1 = arith.extui %0 : i1 to i32
    %c0_i32_0 = arith.constant 0 : i32
    %2 = arith.cmpi ne, %1, %c0_i32_0 : i32
    scf.if %2 {
      %cst_10 = arith.constant 0.000000e+00 : f32
      %15 = vector.broadcast %cst_10 : f32 to vector<1x512xf32>
      %c0_11 = arith.constant 0 : index
      %c0_12 = arith.constant 0 : index
      %16 = vector.load %arg7[%c0_11, %c0_12] : memref<1x512xf32, #tpu.memory_space<vmem>>, vector<1x512xf32>
      tpu.vector_store %arg7[%c0_11, %c0_12], %15 {strides = array<i32>} : memref<1x512xf32, #tpu.memory_space<vmem>>, vector<1x512xf32>,
      %c0_13 = arith.constant 0 : index
      %c0_14 = arith.constant 0 : index
      %17 = vector.load %arg3[%c0_13, %c0_14] : memref<8x32xf32, #tpu.memory_space<vmem>>, vector<8x32xf32>
      %18 = vector.extract_strided_slice %17 {offsets = [0, 0], sizes = [4, 32], strides = [1, 1]} : vector<8x32xf32> to vector<4x32xf32>
      %19 = vector.extract_strided_slice %17 {offsets = [4, 0], sizes = [4, 32], strides = [1, 1]} : vector<8x32xf32> to vector<4x32xf32>
      %20 = arith.subf %18, %19 : vector<4x32xf32>
      %21 = arith.mulf %20, %20 : vector<4x32xf32>
      %cst_15 = arith.constant dense<0.000000e+00> : vector<4xf32>
      %22 = vector.multi_reduction <add>, %21, %cst_15 [1] : vector<4x32xf32> to vector<4xf32>
      %23 = vector.shape_cast %22 : vector<4xf32> to vector<4x1xf32>
      %24 = math.sqrt %23 : vector<4x1xf32>
      %c0_16 = arith.constant 0 : index
      %c0_17 = arith.constant 0 : index
      %25 = vector.load %arg4[%c0_16, %c0_17] : memref<8x1xi32, #tpu.memory_space<vmem>>, vector<4x1xi32>
      %c4 = arith.constant 4 : index
      %c0_18 = arith.constant 0 : index
      %26 = vector.load %arg4[%c4, %c0_18] : memref<8x1xi32, #tpu.memory_space<vmem>>, vector<4x1xi32>
      %27 = arith.cmpi eq, %25, %26 : vector<4x1xi32>
      %28 = arith.extui %27 : vector<4x1xi1> to vector<4x1xi32>
      %29 = arith.sitofp %28 : vector<4x1xi32> to vector<4x1xf32>
      %30 = arith.mulf %29, %24 : vector<4x1xf32>
      %cst_19 = arith.constant 1.000000e+00 : f32
      %31 = vector.broadcast %cst_19 : f32 to vector<4x1xf32>
      %32 = arith.subf %31, %29 : vector<4x1xf32>
      %cst_20 = arith.constant 1.000000e+01 : f32
      %33 = vector.broadcast %cst_20 : f32 to vector<4x1xf32>
      %34 = arith.subf %33, %24 : vector<4x1xf32>
      %cst_21 = arith.constant 0.000000e+00 : f32
      %35 = vector.broadcast %cst_21 : f32 to vector<4x1xf32>
      %36 = arith.maximumf %34, %35 : vector<4x1xf32>
      %37 = arith.mulf %32, %36 : vector<4x1xf32>
      %38 = arith.addf %30, %37 : vector<4x1xf32>
      %39 = vector.shape_cast %38 : vector<4x1xf32> to vector<1x4x1xf32>
      %cst_22 = arith.constant dense<0.000000e+00> : vector<1xf32>
      %40 = vector.multi_reduction <add>, %39, %cst_22 [1, 2] : vector<1x4x1xf32> to vector<1xf32>
      %41 = vector.shape_cast %40 : vector<1xf32> to vector<1x1x1xf32>
      %42 = vector.extract %41[0, 0, 0] : f32 from vector<1x1x1xf32>
      %cst_23 = arith.constant 4.000000e+00 : f32
      %43 = arith.divf %42, %cst_23 : f32
      %c0_24 = arith.constant 0 : index
      %c0_25 = arith.constant 0 : index
      %44 = memref.load %arg6[%c0_24, %c0_25] : memref<1x1xf32, #tpu.memory_space<smem>>
      memref.store %43, %arg6[%c0_24, %c0_25] : memref<1x1xf32, #tpu.memory_space<smem>>
    } else {
    }
    %c0 = arith.constant 0 : index
    %c0_1 = arith.constant 0 : index
    %3 = vector.load %arg1[%c0, %c0_1] : memref<8x512xf32, #tpu.memory_space<vmem>>, vector<8x512xf32>
    %c0_2 = arith.constant 0 : index
    %c0_3 = arith.constant 0 : index
    %4 = vector.load %arg2[%c0_2, %c0_3] : memref<8x512xf32, #tpu.memory_space<vmem>>, vector<8x512xf32>
    %5 = arith.subf %3, %4 : vector<8x512xf32>
    %c0_4 = arith.constant 0 : index
    %c0_5 = arith.constant 0 : index
    %6 = vector.load %arg7[%c0_4, %c0_5] : memref<1x512xf32, #tpu.memory_space<vmem>>, vector<1x512xf32>
    %7 = arith.mulf %5, %5 : vector<8x512xf32>
    %cst = arith.constant dense<0.000000e+00> : vector<512xf32>
    %8 = vector.multi_reduction <add>, %7, %cst [0] : vector<8x512xf32> to vector<512xf32>
    %9 = vector.shape_cast %8 : vector<512xf32> to vector<1x512xf32>
    %10 = arith.addf %6, %9 : vector<1x512xf32>
    %c0_6 = arith.constant 0 : index
    %c0_7 = arith.constant 0 : index
    %11 = vector.load %arg7[%c0_6, %c0_7] : memref<1x512xf32, #tpu.memory_space<vmem>>, vector<1x512xf32>
    tpu.vector_store %arg7[%c0_6, %c0_7], %10 {strides = array<i32>} : memref<1x512xf32, #tpu.memory_space<vmem>>, vector<1x512xf32>,
    %c0_i32_8 = arith.constant 0 : i32
    %12 = arith.cmpi eq, %arg0, %c0_i32_8 : i32
    %13 = arith.extui %12 : i1 to i32
    %c0_i32_9 = arith.constant 0 : i32
    %14 = arith.cmpi ne, %13, %c0_i32_9 : i32
    scf.if %14 {
      %c0_10 = arith.constant 0 : index
      %c0_11 = arith.constant 0 : index
      %15 = vector.load %arg7[%c0_10, %c0_11] : memref<1x512xf32, #tpu.memory_space<vmem>>, vector<1x512xf32>
      %16 = vector.shape_cast %15 : vector<1x512xf32> to vector<1x1x512xf32>
      %cst_12 = arith.constant dense<0.000000e+00> : vector<1xf32>
      %17 = vector.multi_reduction <add>, %16, %cst_12 [1, 2] : vector<1x1x512xf32> to vector<1xf32>
      %18 = vector.shape_cast %17 : vector<1xf32> to vector<1x1x1xf32>
      %19 = vector.extract %18[0, 0, 0] : f32 from vector<1x1x1xf32>
      %cst_13 = arith.constant 2.048000e+03 : f32
      %20 = arith.divf %19, %cst_13 : f32
      %c0_14 = arith.constant 0 : index
      %c0_15 = arith.constant 0 : index
      %21 = memref.load %arg5[%c0_14, %c0_15] : memref<1x1xf32, #tpu.memory_space<smem>>
      memref.store %20, %arg5[%c0_14, %c0_15] : memref<1x1xf32, #tpu.memory_space<smem>>
    } else {
    }
    return
  }
  func.func @transform_0(%arg0: i32) -> (i32, i32) {
    %c0_i32 = arith.constant 0 : i32
    %c0_i32_0 = arith.constant 0 : i32
    return %arg0, %c0_i32 : i32, i32
  }
  func.func @transform_1(%arg0: i32) -> (i32, i32) {
    %c0_i32 = arith.constant 0 : i32
    %c0_i32_0 = arith.constant 0 : i32
    return %arg0, %c0_i32 : i32, i32
  }
  func.func @transform_2(%arg0: i32) -> (i32, i32) {
    %c0_i32 = arith.constant 0 : i32
    %c0_i32_0 = arith.constant 0 : i32
    %c0_i32_1 = arith.constant 0 : i32
    return %c0_i32, %c0_i32_0 : i32, i32
  }
  func.func @transform_3(%arg0: i32) -> (i32, i32) {
    %c0_i32 = arith.constant 0 : i32
    %c0_i32_0 = arith.constant 0 : i32
    %c0_i32_1 = arith.constant 0 : i32
    return %c0_i32, %c0_i32_0 : i32, i32
  }
  func.func @transform_4(%arg0: i32) -> (i32, i32) {
    %c0_i32 = arith.constant 0 : i32
    %c0_i32_0 = arith.constant 0 : i32
    %c0_i32_1 = arith.constant 0 : i32
    return %c0_i32, %c0_i32_0 : i32, i32
  }
  func.func @transform_5(%arg0: i32) -> (i32, i32) {
    %c0_i32 = arith.constant 0 : i32
    %c0_i32_0 = arith.constant 0 : i32
    %c0_i32_1 = arith.constant 0 : i32
    return %c0_i32, %c0_i32_0 : i32, i32
  }
}

</mosaic_0001>

<llo_original>
// kernel: tpu_custom_call.1
$region0: #{tpu_custom_call.1}
  #allocation0 [shape = 'u32[]', space=smem, size = 0x4, offset = 0x4, fixed_abs, tag = 'smem constant byte address 0x4 - core index']
  #allocation1 [shape = 'u32[144,128]{1,0:T(1,128)}', space=vmem, size = 0x12000, scoped, tag = 'internal scratch']
  #allocation2 [shape = 'f32[1,512]{1,0:T(1,128)}', space=vmem, size = 0x800, scoped, tag = 'scratch operand']
  %s0 = inlined_call_operand.hbm [shape: f32[8,512], index: 0, kind: input, shape index: {}]
  %s1 = inlined_call_operand.hbm [shape: f32[8,512], index: 1, kind: input, shape index: {}]
  %s2 = inlined_call_operand.vmem [shape: f32[8,32], index: 2, kind: input, shape index: {}]
  %s3 = inlined_call_operand.vmem [shape: s32[8,1], index: 3, kind: input, shape index: {}]
  %s4 = inlined_call_operand.hbm [shape: f32[1,1], index: 4, kind: output, shape index: {0}]
  %s5 = inlined_call_operand.hbm [shape: f32[1,1], index: 5, kind: output, shape index: {1}]
  %6 = xla_tuple %s4, %s5
  %s7 = sld [smem:[#allocation0]]
  $region50: #{tpu_custom_call.1} parent=0
    _
  %s9 = ssub.s32 1, %s7
  %s10 = scalar_select 0, %s9, %s7
  $region1: #{tpu_custom_call.1} parent=0
    #allocation3 [shape = 'u8[16384]{0}', space=vmem, size = 0x4000, scoped, tag = 'input window, operand 0, single buffered']
    #allocation4 [shape = 's32[1]{0}', space=sflag, size = 0x4, scoped, tag = 'scoped memory for tpu_custom_call.1']
    #allocation5 [shape = 's32[1]{0}', space=sflag, size = 0x4, scoped, tag = 'scoped memory for tpu_custom_call.1']
    #allocation6 [shape = 'u8[16384]{0}', space=vmem, size = 0x4000, scoped, tag = 'input window, operand 1, single buffered']
    #allocation7 [shape = 's32[1]{0}', space=sflag, size = 0x4, scoped, tag = 'scoped memory for tpu_custom_call.1']
    #allocation8 [shape = 'u8[512]{0}', space=smem, size = 0x200, scoped, tag = 'output window, operand 0, single buffered']
    #allocation9 [shape = 'u8[512]{0}', space=smem, size = 0x200, scoped, tag = 'output window, operand 1, single buffered']
    #allocation10 [shape = 's32[1]{0}', space=sflag, size = 0x4, scoped, tag = 'scoped memory for tpu_custom_call.1']
    %11 = vsyncpa [#allocation4], 0
    %12 = vsyncpa [#allocation7], 0
    %13 = vsyncpa [#allocation5], 0
    %14 = vsyncpa [#allocation10], 0
    // Predicated region
    $region2: #{tpu_custom_call.1} parent=1 // pred_check
      _
    $region3: #{tpu_custom_call.1} parent=1 // pred_check_branch
      %16 = sbr.rel (0) target = $region5
    $region4: #{tpu_custom_call.1} parent=1 // pred_region
      %s18 = ssub.s32 512, 512
      %19 = vsyncadd [#allocation4], %s18
      %s21 = sshll.u32 [#allocation3], 4
      %s22 = int_to_ptr.vmem [resolvable:$true] %s21
      %24 = dma.hbm_to_vmem [thread:$0]  %s0, 512, %s22, [#allocation4]
    $region5: #{tpu_custom_call.1} parent=1 // pred_fallthru
      _
    // Predicated region
    $region6: #{tpu_custom_call.1} parent=1 // pred_check
      _
    $region7: #{tpu_custom_call.1} parent=1 // pred_check_branch
      %26 = sbr.rel (0) target = $region9
    $region8: #{tpu_custom_call.1} parent=1 // pred_region
      %s28 = ssub.s32 512, 512
      %29 = vsyncadd [#allocation7], %s28
      %s31 = sshll.u32 [#allocation6], 4
      %s32 = int_to_ptr.vmem [resolvable:$true] %s31
      %34 = dma.hbm_to_vmem [thread:$0]  %s1, 512, %s32, [#allocation7]
    $region9: #{tpu_custom_call.1} parent=1 // pred_fallthru
      _
    // Predicated region
    $region10: #{tpu_custom_call.1} parent=1 // pred_check
      _
    $region11: #{tpu_custom_call.1} parent=1 // pred_check_branch
      %36 = sbr.rel (0) target = $region13
    $region12: #{tpu_custom_call.1} parent=1 // pred_region
      _
    $region13: #{tpu_custom_call.1} parent=1 // pred_fallthru
      _
    // Predicated region
    $region14: #{tpu_custom_call.1} parent=1 // pred_check
      _
    $region15: #{tpu_custom_call.1} parent=1 // pred_check_branch
      %38 = sbr.rel (0) target = $region17
    $region16: #{tpu_custom_call.1} parent=1 // pred_region
      _
    $region17: #{tpu_custom_call.1} parent=1 // pred_fallthru
      _
    // Predicated region
    $region18: #{tpu_custom_call.1} parent=1 // pred_check
      _
    $region19: #{tpu_custom_call.1} parent=1 // pred_check_branch
      %40 = sbr.rel (0) target = $region21
    $region20: #{tpu_custom_call.1} parent=1 // pred_region
      %41 = dma.done [#allocation4], 512
    $region21: #{tpu_custom_call.1} parent=1 // pred_fallthru
      _
    // Predicated region
    $region22: #{tpu_custom_call.1} parent=1 // pred_check
      _
    $region23: #{tpu_custom_call.1} parent=1 // pred_check_branch
      %43 = sbr.rel (0) target = $region25
    $region24: #{tpu_custom_call.1} parent=1 // pred_region
      %44 = dma.done [#allocation7], 512
    $region25: #{tpu_custom_call.1} parent=1 // pred_fallthru
      _
    %p45 = scmp.eq.s32.totalorder 0, 0
    // Predicated region
    $region26: #{tpu_custom_call.1} parent=1 // pred_check
      %p46 = pneg %p45
    $region27: #{tpu_custom_call.1} parent=1 // pred_check_branch
      %48 = sbr.rel (%p46) target = $region29
    $region28: #{tpu_custom_call.1} parent=1 // pred_region
      %v49 = vlaneseq
      %vm50 = vcmp.ge.s32.totalorder %v49, 0
      %vm51 = vcmp.lt.s32.totalorder %v49, 512
      %vm52 = vmand %vm50, %vm51
      %53 = vst.msk [vmem:[#allocation2] sm:$0xf] %vm52, 0.0
      %v54 = vld [vmem:[%s2] sm:$0xff]
      %v56 = vrot.slane %v54, 4
      %v58 = vsub.f32 %v54, %v56
      %v59 = vmul.f32 %v58, %v58
      %vm60 = vcmask 257024
      %v61 = vsel %vm60, %v59, 0.0
      %62 = vadd.xlane.f32.xlu0 %v61
      %v63 = vpop.xlane.xlu0 %62
      %v64 = vrsqrt.pop %v63
      %v65 = vmul.f32 %v63, %v64
      %vm66 = vcmp.eq.f32.partialorder %v63, inf
      %v67 = vsel %vm66, %v63, %v65
      %vm68 = vcmp.eq.f32.partialorder %v63, 0.0
      %v69 = vand.u32 %v63, 2147483648
      %v70 = vsel %vm68, %v69, %v67
      %v71 = vld [vmem:[%s3] sm:$0xf]
      %v72 = vld [vmem:[%s3 + $0x4] sm:$0xf]
      %vm73 = vcmp.eq.s32.totalorder %v71, %v72
      %v74 = vsel %vm73, 1, 0
      %v75 = vcvt.s32.f32 %v74
      %v76 = vmul.f32 %v75, %v70
      %v77 = vsub.f32 1.0, %v75
      %v78 = vsub.f32 10.0, %v70
      %v79 = vmax.f32 %v78, 0.0
      %v80 = vmul.f32 %v77, %v79
      %v81 = vadd.f32 %v76, %v80
      %vm82 = vcmask 3072
      %v83 = vsel %vm82, %v81, 0.0
      %84 = vadd.xlane.f32.xlu0 %v83
      %v85 = vpop.xlane.xlu0 %84
      %v86 = vrot.slane %v85, 4
      %v87 = vadd.f32 %v85, %v86
      %v88 = vrot.slane %v87, 2
      %v89 = vadd.f32 %v87, %v88
      %v90 = vrot.slane %v89, 1
      %v91 = vadd.f32 %v89, %v90
      %s92 = vtos %v91
      %v93 = vrcp.pop 4.0
      %s94 = vtos %v93
      %s95 = smul.f32 %s92, %s94
      %s96 = scalar_lea.smem [#allocation9], 0
      %97 = sst [smem:[%s96]] %s95
    $region29: #{tpu_custom_call.1} parent=1 // pred_fallthru
      _
    %v98 = vld [vmem:[#allocation3] sm:$0xff]
    %v99 = vld [vmem:[#allocation3 + $0x8] sm:$0xff]
    %v100 = vld [vmem:[#allocation3 + $0x10] sm:$0xff]
    %v101 = vld [vmem:[#allocation3 + $0x18] sm:$0xff]
    %v102 = vld [vmem:[#allocation6] sm:$0xff]
    %v103 = vld [vmem:[#allocation6 + $0x8] sm:$0xff]
    %v104 = vld [vmem:[#allocation6 + $0x10] sm:$0xff]
    %v105 = vld [vmem:[#allocation6 + $0x18] sm:$0xff]
    %v106 = vsub.f32 %v98, %v102
    %v107 = vsub.f32 %v99, %v103
    %v108 = vsub.f32 %v100, %v104
    %v109 = vsub.f32 %v101, %v105
    %v110 = vld [vmem:[#allocation2] sm:$0xf]
    %v111 = vmul.f32 %v106, %v106
    %v112 = vmul.f32 %v107, %v107
    %v113 = vmul.f32 %v108, %v108
    %v114 = vmul.f32 %v109, %v109
    %v115 = vrot.slane %v111, 4
    %v116 = vadd.f32 %v111, %v115
    %v117 = vrot.slane %v116, 2
    %v118 = vadd.f32 %v116, %v117
    %v119 = vrot.slane %v118, 1
    %v120 = vadd.f32 %v118, %v119
    %v121 = vrot.slane %v112, 4
    %v122 = vadd.f32 %v112, %v121
    %v123 = vrot.slane %v122, 2
    %v124 = vadd.f32 %v122, %v123
    %v125 = vrot.slane %v124, 1
    %v126 = vadd.f32 %v124, %v125
    %v127 = vrot.slane %v113, 4
    %v128 = vadd.f32 %v113, %v127
    %v129 = vrot.slane %v128, 2
    %v130 = vadd.f32 %v128, %v129
    %v131 = vrot.slane %v130, 1
    %v132 = vadd.f32 %v130, %v131
    %v133 = vrot.slane %v114, 4
    %v134 = vadd.f32 %v114, %v133
    %v135 = vrot.slane %v134, 2
    %v136 = vadd.f32 %v134, %v135
    %v137 = vrot.slane %v136, 1
    %v138 = vadd.f32 %v136, %v137
    %v143 = vcombine.low %v120, %v126
    %v144 = vcombine.low %v132, %v138
    %v146 = vunpack.c.l.s4 1966171168
    %v147 = vunpack.c.0.s8 %v146
    %v148 = vlaneseq
    %v149 = vshrl.u32 %v148, 7
    %v150 = vsub.s32 %v147, %v149
    %v151 = vrot.slane %v143, %v150
    %v153 = vunpack.c.l.s4 1966171168
    %v154 = vunpack.c.0.s8 %v153
    %v155 = vlaneseq
    %v156 = vshrl.u32 %v155, 7
    %v157 = vsub.s32 %v154, %v156
    %v158 = vrot.slane %v144, %v157
    %v159 = vcombine.low %v151, %v158
    %v161 = vunpack.c.l.s4 1966171168
    %v162 = vunpack.c.0.s8 %v161
    %v163 = vlaneseq
    %v164 = vshrl.u32 %v163, 7
    %v165 = vsub.s32 %v162, %v164
    %v166 = vrot.slane %v159, %v165
    %v168 = vadd.f32 %v110, %v166
    %v169 = vlaneseq
    %vm170 = vcmp.ge.s32.totalorder %v169, 0
    %vm171 = vcmp.lt.s32.totalorder %v169, 512
    %vm172 = vmand %vm170, %vm171
    %173 = vst.msk [vmem:[#allocation2] sm:$0xf] %vm172, %v168
    // Predicated region
    $region30: #{tpu_custom_call.1} parent=1 // pred_check
      %p174 = pneg %p45
    $region31: #{tpu_custom_call.1} parent=1 // pred_check_branch
      %176 = sbr.rel (%p174) target = $region33
    $region32: #{tpu_custom_call.1} parent=1 // pred_region
      %v177 = vld [vmem:[#allocation2] sm:$0xf]
      %v179 = vlaneseq
      %v180 = vshrl.u32 %v179, 7
      %v181 = vsub.s32 0, %v180
      %v182 = vrot.slane %v177, %v181
      %v183 = vlaneseq
      %v184 = vshrl.u32 %v183, 7
      %v185 = vsub.s32 1, %v184
      %v186 = vrot.slane %v177, %v185
      %v187 = vlaneseq
      %v188 = vshrl.u32 %v187, 7
      %v189 = vsub.s32 2, %v188
      %v190 = vrot.slane %v177, %v189
      %v191 = vlaneseq
      %v192 = vshrl.u32 %v191, 7
      %v193 = vsub.s32 3, %v192
      %v194 = vrot.slane %v177, %v193
      %vm199 = vcmask 1040384
      %v200 = vsel %vm199, %v182, 0.0
      %v201 = vsel %vm199, %v186, 0.0
      %v202 = vadd.f32 %v200, %v201
      %v203 = vsel %vm199, %v190, 0.0
      %v204 = vadd.f32 %v202, %v203
      %v205 = vsel %vm199, %v194, 0.0
      %v206 = vadd.f32 %v204, %v205
      %207 = vadd.xlane.f32.xlu0 %v206
      %v208 = vpop.xlane.xlu0 %207
      %v209 = vrot.slane %v208, 4
      %v210 = vadd.f32 %v208, %v209
      %v211 = vrot.slane %v210, 2
      %v212 = vadd.f32 %v210, %v211
      %v213 = vrot.slane %v212, 1
      %v214 = vadd.f32 %v212, %v213
      %s215 = vtos %v214
      %v216 = vrcp.pop 2048.0
      %s217 = vtos %v216
      %s218 = smul.f32 %s215, %s217
      %s219 = scalar_lea.smem [#allocation8], 0
      %220 = sst [smem:[%s219]] %s218
    $region33: #{tpu_custom_call.1} parent=1 // pred_fallthru
      _
    // Predicated region
    $region34: #{tpu_custom_call.1} parent=1 // pred_check
      _
    $region35: #{tpu_custom_call.1} parent=1 // pred_check_branch
      %222 = sbr.rel (0) target = $region37
    $region36: #{tpu_custom_call.1} parent=1 // pred_region
      %s224 = ssub.s32 16, 16
      %225 = vsyncadd [#allocation5], %s224
      %228 = dma.smem_to_hbm [#allocation8], 16, %s4, [#allocation5]
    $region37: #{tpu_custom_call.1} parent=1 // pred_fallthru
      _
    // Predicated region
    $region38: #{tpu_custom_call.1} parent=1 // pred_check
      _
    $region39: #{tpu_custom_call.1} parent=1 // pred_check_branch
      %230 = sbr.rel (0) target = $region41
    $region40: #{tpu_custom_call.1} parent=1 // pred_region
      %s232 = ssub.s32 16, 16
      %233 = vsyncadd [#allocation10], %s232
      %236 = dma.smem_to_hbm [#allocation9], 16, %s5, [#allocation10]
    $region41: #{tpu_custom_call.1} parent=1 // pred_fallthru
      _
    // Predicated region
    $region42: #{tpu_custom_call.1} parent=1 // pred_check
      _
    $region43: #{tpu_custom_call.1} parent=1 // pred_check_branch
      %238 = sbr.rel (0) target = $region45
    $region44: #{tpu_custom_call.1} parent=1 // pred_region
      %239 = dma.done [#allocation5], 16
    $region45: #{tpu_custom_call.1} parent=1 // pred_fallthru
      _
    // Predicated region
    $region46: #{tpu_custom_call.1} parent=1 // pred_check
      _
    $region47: #{tpu_custom_call.1} parent=1 // pred_check_branch
      %241 = sbr.rel (0) target = $region49
    $region48: #{tpu_custom_call.1} parent=1 // pred_region
      %242 = dma.done [#allocation10], 16
    $region49: #{tpu_custom_call.1} parent=1 // pred_fallthru
      _
    %243 = sfence
    %244 = vsyncpa [#allocation4], 1
    %245 = vsyncpa [#allocation7], 1
    %246 = vsyncpa [#allocation5], 1
    %247 = vsyncpa [#allocation10], 1

</llo_original>
